<compile_context>
chip_gen: v7x
topology: tpu7x:2x2x1
jax: 0.10.0
libtpu: 0.0.40
codegen_flags: <defaults>
</compile_context>

<pallas_src>
import functools
import math

import jax
import jax.numpy as jnp
from jax.experimental import pallas as pl
from jax.experimental.pallas import tpu as pltpu


# ---------------------------------------------------------------------------
# Buffer setup (mirrors PositionalEncoding.__init__)
# ---------------------------------------------------------------------------
def make_positional_table(d_model: int, max_len: int = 5000) -> jnp.ndarray:
    """Returns pe with shape (max_len, 1, d_model), matching the PyTorch buffer."""
    position = jnp.arange(max_len, dtype=jnp.float32)[:, None]                 # (L, 1)
    div_term = jnp.exp(
        jnp.arange(0, d_model, 2, dtype=jnp.float32) * (-math.log(10000.0) / d_model)
    )                                                                           # (D/2,)
    pe = jnp.zeros((max_len, d_model), jnp.float32)
    pe = pe.at[:, 0::2].set(jnp.sin(position * div_term))
    pe = pe.at[:, 1::2].set(jnp.cos(position * div_term))
    return pe[:, None, :]                                                       # (L, 1, D)


# ---------------------------------------------------------------------------
# Kernels
# ---------------------------------------------------------------------------
def _pe_add_kernel(x_ref, pe_ref, o_ref):
    # x_ref: (TS, B, D); pe_ref: (TS, 1, D) -> broadcast add over batch (sublanes).
    o_ref[...] = x_ref[...] + pe_ref[...].astype(x_ref.dtype)


def _pe_add_dropout_kernel(x_ref, pe_ref, bits_ref, o_ref, *, threshold: int, scale: float):
    # Inverted dropout: drop iff uniform uint32 bits < threshold (= p * 2^32),
    # otherwise scale by 1/(1-p).  Single compare + select + multiply per vreg.
    y = x_ref[...] + pe_ref[...].astype(x_ref.dtype)
    keep = bits_ref[...] >= jnp.uint32(threshold)
    o_ref[...] = jnp.where(keep, y * scale, jnp.zeros_like(y))


# ---------------------------------------------------------------------------
# Tiling helper
# ---------------------------------------------------------------------------
def _round_up(n: int, m: int) -> int:
    return (n + m - 1) // m * m


def _choose_seq_tile(S, B, D, x_itemsize, with_bits, vmem_budget_bytes=16 * 1024 * 1024):
    """Pick a seq-tile so all double-buffered blocks stay well under the VMEM limit."""
    per_row = 2 * B * D * x_itemsize                 # x block + out block
    if with_bits:
        per_row += B * D * 4                         # uint32 bits block
    per_row += 8 * _round_up(D, 128) * 4             # (TS,1,D) f32 pe tile, sublane/lane padded
    ts = vmem_budget_bytes // (2 * per_row)          # 2x: double buffering
    ts = max(1, min(int(ts), 2048, S))
    if ts >= 8:
        ts = (ts // 8) * 8
    return ts


# ---------------------------------------------------------------------------
# Forward pass: out = dropout(x + pe[:S])
# ---------------------------------------------------------------------------
def positional_encoding(x, pe, *, p: float = 0.1, training: bool = True, key=None):
    """x: (S, B, D); pe: (max_len, 1, D) from make_positional_table; key for dropout."""
    S, B, D = x.shape
    assert pe.ndim == 3 and pe.shape[1] == 1 and pe.shape[2] == D and pe.shape[0] >= S

    use_dropout = bool(training) and p > 0.0
    if use_dropout and p >= 1.0:
        return jnp.zeros_like(x)

    x_itemsize = jnp.dtype(x.dtype).itemsize
    ts = _choose_seq_tile(S, B, D, x_itemsize, with_bits=use_dropout)
    grid = (pl.cdiv(S, ts),)

    x_spec = pl.BlockSpec((ts, B, D), lambda i: (i, 0, 0))
    pe_spec = pl.BlockSpec((ts, 1, D), lambda i: (i, 0, 0))
    out_spec = pl.BlockSpec((ts, B, D), lambda i: (i, 0, 0))

    compiler_params = pltpu.CompilerParams(
        dimension_semantics=("parallel",),           # seq tiles are independent -> TC sharding on v7x
        vmem_limit_bytes=32 * 1024 * 1024,
    )
    out_shape = jax.ShapeDtypeStruct((S, B, D), x.dtype)

    if not use_dropout:
        return pl.pallas_call(
            _pe_add_kernel,
            out_shape=out_shape,
            grid=grid,
            in_specs=[x_spec, pe_spec],
            out_specs=out_spec,
            compiler_params=compiler_params,
        )(x, pe)

    if key is None:
        raise ValueError("training-mode dropout requires a PRNG `key`")

    # TODO(synk): on a TPU-only deployment, replace this streamed `bits` input with
    # in-kernel pltpu.prng_random_bits + tile-aware pltpu.prng_seed(seed + pl.program_id(0))
    # to drop one HBM input stream; those primitives have no CPU/interpret lowering.
    bits = jax.random.bits(key, (S, B, D), dtype=jnp.uint32)
    threshold = min(int(round(p * float(1 << 32))), (1 << 32) - 1)
    scale = 1.0 / (1.0 - p)
    kernel = functools.partial(_pe_add_dropout_kernel, threshold=threshold, scale=scale)
    bits_spec = pl.BlockSpec((ts, B, D), lambda i: (i, 0, 0))

    return pl.pallas_call(
        kernel,
        out_shape=out_shape,
        grid=grid,
        in_specs=[x_spec, pe_spec, bits_spec],
        out_specs=out_spec,
        compiler_params=compiler_params,
    )(x, pe, bits)


# ---------------------------------------------------------------------------
# Demo / correctness check
# ---------------------------------------------------------------------------
if __name__ == "__main__":
    S, B, D = 8, 2, 32          # (seq_len, batch, d_model)
    key = jax.random.PRNGKey(0)
    kx, kdrop = jax.random.split(key)
    x = jax.random.normal(kx, (S, B, D), dtype=jnp.float32)
    pe = make_positional_table(D, max_len=5000)     # (5000, 1, 32)

    # Training mode (stochastic inverted dropout).
    out_train = positional_encoding(x, pe, p=0.1, training=True, key=kdrop)
    jax.block_until_ready(out_train)

    # Eval mode (dropout = identity) -- check against pure-JAX reference.
    out_eval = positional_encoding(x, pe, p=0.1, training=False)
    jax.block_until_ready(out_eval)

    ref = x + pe[:S]                                 # broadcast over batch
    assert out_eval.shape == (S, B, D)
    assert jnp.allclose(out_eval, ref, atol=1e-6), "mismatch vs reference add (eval)"

    # Training output: every element is either dropped (0) or ref / (1 - p).
    scaled = ref / (1.0 - 0.1)
    ok = jnp.where(out_train == 0.0, True,
                   jnp.isclose(out_train, scaled, rtol=1e-5, atol=1e-6))
    assert out_train.shape == (S, B, D)
    assert bool(jnp.all(ok)), "training output is not {0, (x+pe)/(1-p)}"

    print("KERNEL_OK")
</pallas_src>

<mosaic_0001>
module attributes {stable_mosaic.version = 11 : i64} {
  func.func @_pe_add_dropout_kernel(%arg0: i32, %arg1: memref<8x2x32xf32, #tpu.memory_space<vmem>>, %arg2: memref<8x1x32xf32, #tpu.memory_space<vmem>>, %arg3: memref<8x2x32xi32, #tpu.memory_space<vmem>>, %arg4: memref<8x2x32xf32, #tpu.memory_space<vmem>>) attributes {dimension_semantics = [#tpu.dimension_semantics<parallel>], iteration_bounds = array<i64: 1>, scalar_prefetch = 0 : i64, scratch_operands = 0 : i64, tpu.core_type = #tpu.core_type<tc>, window_params = [{transform_indices = @transform_0, window_bounds = array<i64: 8, 2, 32>}, {transform_indices = @transform_1, window_bounds = array<i64: 8, 1, 32>}, {transform_indices = @transform_2, window_bounds = array<i64: 8, 2, 32>}, {transform_indices = @transform_3, window_bounds = array<i64: 8, 2, 32>}]} {
    %c0 = arith.constant 0 : index
    %c0_0 = arith.constant 0 : index
    %c0_1 = arith.constant 0 : index
    %0 = vector.load %arg1[%c0, %c0_0, %c0_1] : memref<8x2x32xf32, #tpu.memory_space<vmem>>, vector<8x2x32xf32>
    %c0_2 = arith.constant 0 : index
    %c0_3 = arith.constant 0 : index
    %c0_4 = arith.constant 0 : index
    %1 = vector.load %arg2[%c0_2, %c0_3, %c0_4] : memref<8x1x32xf32, #tpu.memory_space<vmem>>, vector<8x1x32xf32>
    %2 = vector.broadcast %1 : vector<8x1x32xf32> to vector<8x2x32xf32>
    %3 = arith.addf %0, %2 : vector<8x2x32xf32>
    %c0_5 = arith.constant 0 : index
    %c0_6 = arith.constant 0 : index
    %c0_7 = arith.constant 0 : index
    %4 = vector.load %arg3[%c0_5, %c0_6, %c0_7] : memref<8x2x32xi32, #tpu.memory_space<vmem>>, vector<8x2x32xi32>
    %c429496730_i32 = arith.constant 429496730 : i32
    %5 = vector.broadcast %c429496730_i32 : i32 to vector<8x2x32xi32>
    %6 = arith.cmpi uge, %4, %5 : vector<8x2x32xi32>
    %cst = arith.constant 1.11111116 : f32
    %7 = vector.broadcast %cst : f32 to vector<8x2x32xf32>
    %8 = arith.mulf %3, %7 : vector<8x2x32xf32>
    %cst_8 = arith.constant 0.000000e+00 : f32
    %9 = vector.broadcast %cst_8 : f32 to vector<8x2x32xf32>
    %10 = arith.select %6, %8, %9 : vector<8x2x32xi1>, vector<8x2x32xf32>
    %c0_9 = arith.constant 0 : index
    %c0_10 = arith.constant 0 : index
    %c0_11 = arith.constant 0 : index
    %11 = vector.load %arg4[%c0_9, %c0_10, %c0_11] : memref<8x2x32xf32, #tpu.memory_space<vmem>>, vector<8x2x32xf32>
    tpu.vector_store %arg4[%c0_9, %c0_10, %c0_11], %10 {strides = array<i32>} : memref<8x2x32xf32, #tpu.memory_space<vmem>>, vector<8x2x32xf32>,
    return
  }
  func.func @transform_0(%arg0: i32) -> (i32, i32, i32) {
    %c0_i32 = arith.constant 0 : i32
    %c0_i32_0 = arith.constant 0 : i32
    %c0_i32_1 = arith.constant 0 : i32
    return %arg0, %c0_i32, %c0_i32_0 : i32, i32, i32
  }
  func.func @transform_1(%arg0: i32) -> (i32, i32, i32) {
    %c0_i32 = arith.constant 0 : i32
    %c0_i32_0 = arith.constant 0 : i32
    %c0_i32_1 = arith.constant 0 : i32
    return %arg0, %c0_i32, %c0_i32_0 : i32, i32, i32
  }
  func.func @transform_2(%arg0: i32) -> (i32, i32, i32) {
    %c0_i32 = arith.constant 0 : i32
    %c0_i32_0 = arith.constant 0 : i32
    %c0_i32_1 = arith.constant 0 : i32
    return %arg0, %c0_i32, %c0_i32_0 : i32, i32, i32
  }
  func.func @transform_3(%arg0: i32) -> (i32, i32, i32) {
    %c0_i32 = arith.constant 0 : i32
    %c0_i32_0 = arith.constant 0 : i32
    %c0_i32_1 = arith.constant 0 : i32
    return %arg0, %c0_i32, %c0_i32_0 : i32, i32, i32
  }
}

</mosaic_0001>

<llo_original>
// kernel: tpu_custom_call.1
$region0: #{tpu_custom_call.1}
  #allocation0 [shape = 'u32[]', space=smem, size = 0x4, offset = 0x4, fixed_abs, tag = 'smem constant byte address 0x4 - core index']
  #allocation1 [shape = 'u32[144,128]{1,0:T(1,128)}', space=vmem, size = 0x12000, scoped, tag = 'internal scratch']
  %s0 = inlined_call_operand.vmem [shape: f32[8,2,32], index: 0, kind: input, shape index: {}]
  %s1 = inlined_call_operand.vmem [shape: f32[5000,1,32], index: 1, kind: input, shape index: {}]
  %s2 = inlined_call_operand.vmem [shape: u32[8,2,32], index: 2, kind: input, shape index: {}]
  %s3 = inlined_call_operand.hbm [shape: f32[8,2,32], index: 3, kind: output, shape index: {}]
  %s4 = sld [smem:[#allocation0]]
  $region22: #{tpu_custom_call.1} parent=0
    _
  %s6 = ssub.s32 1, %s4
  %s7 = scalar_select 0, %s6, %s4
  $region1: #{tpu_custom_call.1} parent=0
    #allocation2 [shape = 'u8[8192]{0}', space=vmem, size = 0x2000, scoped, tag = 'output window, operand 0, single buffered']
    #allocation3 [shape = 's32[1]{0}', space=sflag, size = 0x4, scoped, tag = 'scoped memory for tpu_custom_call.1']
    %8 = vsyncpa [#allocation3], 0
    // Predicated region
    $region2: #{tpu_custom_call.1} parent=1 // pred_check
      _
    $region3: #{tpu_custom_call.1} parent=1 // pred_check_branch
      %10 = sbr.rel (0) target = $region5
    $region4: #{tpu_custom_call.1} parent=1 // pred_region
      _
    $region5: #{tpu_custom_call.1} parent=1 // pred_fallthru
      _
    // Predicated region
    $region6: #{tpu_custom_call.1} parent=1 // pred_check
      _
    $region7: #{tpu_custom_call.1} parent=1 // pred_check_branch
      %12 = sbr.rel (0) target = $region9
    $region8: #{tpu_custom_call.1} parent=1 // pred_region
      _
    $region9: #{tpu_custom_call.1} parent=1 // pred_fallthru
      _
    // Predicated region
    $region10: #{tpu_custom_call.1} parent=1 // pred_check
      _
    $region11: #{tpu_custom_call.1} parent=1 // pred_check_branch
      %14 = sbr.rel (0) target = $region13
    $region12: #{tpu_custom_call.1} parent=1 // pred_region
      _
    $region13: #{tpu_custom_call.1} parent=1 // pred_fallthru
      _
    %v15 = vld [vmem:[%s0] sm:$0x3]
    %v16 = vld [vmem:[%s0 + $0x2] sm:$0x3]
    %v17 = vld [vmem:[%s0 + $0x4] sm:$0x3]
    %v18 = vld [vmem:[%s0 + $0x6] sm:$0x3]
    %v19 = vld [vmem:[%s0 + $0x8] sm:$0x3]
    %v20 = vld [vmem:[%s0 + $0xa] sm:$0x3]
    %v21 = vld [vmem:[%s0 + $0xc] sm:$0x3]
    %v22 = vld [vmem:[%s0 + $0xe] sm:$0x3]
    %v23 = vld [vmem:[%s1] sm:$0x1]
    %v24 = vld [vmem:[%s1 + $0x1] sm:$0x1]
    %v25 = vld [vmem:[%s1 + $0x2] sm:$0x1]
    %v26 = vld [vmem:[%s1 + $0x3] sm:$0x1]
    %v27 = vld [vmem:[%s1 + $0x4] sm:$0x1]
    %v28 = vld [vmem:[%s1 + $0x5] sm:$0x1]
    %v29 = vld [vmem:[%s1 + $0x6] sm:$0x1]
    %v30 = vld [vmem:[%s1 + $0x7] sm:$0x1]
    %v39 = vlaneseq
    %v40 = vshrl.u32 %v39, 7
    %v41 = vsub.s32 0, %v40
    %v42 = vrot.slane %v23, %v41
    %v43 = vlaneseq
    %v44 = vshrl.u32 %v43, 7
    %v45 = vsub.s32 0, %v44
    %v46 = vrot.slane %v24, %v45
    %v47 = vlaneseq
    %v48 = vshrl.u32 %v47, 7
    %v49 = vsub.s32 0, %v48
    %v50 = vrot.slane %v25, %v49
    %v51 = vlaneseq
    %v52 = vshrl.u32 %v51, 7
    %v53 = vsub.s32 0, %v52
    %v54 = vrot.slane %v26, %v53
    %v55 = vlaneseq
    %v56 = vshrl.u32 %v55, 7
    %v57 = vsub.s32 0, %v56
    %v58 = vrot.slane %v27, %v57
    %v59 = vlaneseq
    %v60 = vshrl.u32 %v59, 7
    %v61 = vsub.s32 0, %v60
    %v62 = vrot.slane %v28, %v61
    %v63 = vlaneseq
    %v64 = vshrl.u32 %v63, 7
    %v65 = vsub.s32 0, %v64
    %v66 = vrot.slane %v29, %v65
    %v67 = vlaneseq
    %v68 = vshrl.u32 %v67, 7
    %v69 = vsub.s32 0, %v68
    %v70 = vrot.slane %v30, %v69
    %v79 = vadd.f32 %v15, %v42
    %v80 = vadd.f32 %v16, %v46
    %v81 = vadd.f32 %v17, %v50
    %v82 = vadd.f32 %v18, %v54
    %v83 = vadd.f32 %v19, %v58
    %v84 = vadd.f32 %v20, %v62
    %v85 = vadd.f32 %v21, %v66
    %v86 = vadd.f32 %v22, %v70
    %v87 = vld [vmem:[%s2] sm:$0x3]
    %v88 = vld [vmem:[%s2 + $0x2] sm:$0x3]
    %v89 = vld [vmem:[%s2 + $0x4] sm:$0x3]
    %v90 = vld [vmem:[%s2 + $0x6] sm:$0x3]
    %v91 = vld [vmem:[%s2 + $0x8] sm:$0x3]
    %v92 = vld [vmem:[%s2 + $0xa] sm:$0x3]
    %v93 = vld [vmem:[%s2 + $0xc] sm:$0x3]
    %v94 = vld [vmem:[%s2 + $0xe] sm:$0x3]
    %vm95 = vcmp.ge.u32.totalorder %v87, 429496730
    %vm96 = vcmp.ge.u32.totalorder %v88, 429496730
    %vm97 = vcmp.ge.u32.totalorder %v89, 429496730
    %vm98 = vcmp.ge.u32.totalorder %v90, 429496730
    %vm99 = vcmp.ge.u32.totalorder %v91, 429496730
    %vm100 = vcmp.ge.u32.totalorder %v92, 429496730
    %vm101 = vcmp.ge.u32.totalorder %v93, 429496730
    %vm102 = vcmp.ge.u32.totalorder %v94, 429496730
    %v103 = vmul.f32 %v79, 1.1111112
    %v104 = vmul.f32 %v80, 1.1111112
    %v105 = vmul.f32 %v81, 1.1111112
    %v106 = vmul.f32 %v82, 1.1111112
    %v107 = vmul.f32 %v83, 1.1111112
    %v108 = vmul.f32 %v84, 1.1111112
    %v109 = vmul.f32 %v85, 1.1111112
    %v110 = vmul.f32 %v86, 1.1111112
    %v111 = vsel %vm95, %v103, 0.0
    %v112 = vsel %vm96, %v104, 0.0
    %v113 = vsel %vm97, %v105, 0.0
    %v114 = vsel %vm98, %v106, 0.0
    %v115 = vsel %vm99, %v107, 0.0
    %v116 = vsel %vm100, %v108, 0.0
    %v117 = vsel %vm101, %v109, 0.0
    %v118 = vsel %vm102, %v110, 0.0
    %vm119 = vcmask 254976
    %120 = vst.msk [vmem:[#allocation2] sm:$0x3] %vm119, %v111
    %121 = vst.msk [vmem:[#allocation2 + $0x2] sm:$0x3] %vm119, %v112
    %122 = vst.msk [vmem:[#allocation2 + $0x4] sm:$0x3] %vm119, %v113
    %123 = vst.msk [vmem:[#allocation2 + $0x6] sm:$0x3] %vm119, %v114
    %124 = vst.msk [vmem:[#allocation2 + $0x8] sm:$0x3] %vm119, %v115
    %125 = vst.msk [vmem:[#allocation2 + $0xa] sm:$0x3] %vm119, %v116
    %126 = vst.msk [vmem:[#allocation2 + $0xc] sm:$0x3] %vm119, %v117
    %127 = vst.msk [vmem:[#allocation2 + $0xe] sm:$0x3] %vm119, %v118
    // Predicated region
    $region14: #{tpu_custom_call.1} parent=1 // pred_check
      _
    $region15: #{tpu_custom_call.1} parent=1 // pred_check_branch
      %129 = sbr.rel (0) target = $region17
    $region16: #{tpu_custom_call.1} parent=1 // pred_region
      %s131 = ssub.s32 256, 256
      %132 = vsyncadd [#allocation3], %s131
      %s133 = sshll.u32 [#allocation2], 4
      %s134 = int_to_ptr.vmem [resolvable:$true] %s133
      %139 = dma.vmem_to_hbm [thread:$0]  %s134, 256, %s3, [#allocation3], 32, 32, 2
    $region17: #{tpu_custom_call.1} parent=1 // pred_fallthru
      _
    // Predicated region
    $region18: #{tpu_custom_call.1} parent=1 // pred_check
      _
    $region19: #{tpu_custom_call.1} parent=1 // pred_check_branch
      %141 = sbr.rel (0) target = $region21
    $region20: #{tpu_custom_call.1} parent=1 // pred_region
      %142 = dma.done [#allocation3], 256
    $region21: #{tpu_custom_call.1} parent=1 // pred_fallthru
      _
    %143 = vsyncpa [#allocation3], 1

</llo_original>
